<compile_context>
chip_gen: v7x
topology: tpu7x:2x2x1
jax: 0.10.0
libtpu: 0.0.40
codegen_flags: <defaults>
</compile_context>

<pallas_src>
import jax
import jax.numpy as jnp
from jax.experimental import pallas as pl
from jax.experimental.pallas import tpu as pltpu


def _h_sigmoid_kernel(x_ref, o_ref):
    x = x_ref[...]
    if not jnp.issubdtype(x.dtype, jnp.floating):
        # Integer / bool inputs: compute in f32, cast back on store.
        x = x.astype(jnp.float32)
    # relu6(x + 3) / 6   (true divide by 6 to match torch bit-for-bit)
    y = jnp.clip(x + 3.0, 0.0, 6.0) / 6.0
    o_ref[...] = y.astype(o_ref.dtype)


def _round_up(v: int, m: int) -> int:
    return ((v + m - 1) // m) * m


def h_sigmoid(x: jax.Array, *, lane_width: int = 1024,
              max_block_bytes: int = 4 * 1024 * 1024) -> jax.Array:
    """Elementwise hard-sigmoid matching torch: relu6(x + 3) / 6. Any shape."""
    orig_shape = x.shape
    dtype = x.dtype
    n = x.size
    if n == 0:
        return x

    itemsize = jnp.dtype(dtype).itemsize
    # Sublane packing granule: f32 -> 8 rows, bf16 -> 16, int8/fp8 -> 32.
    sub = max(8, 32 // itemsize)

    flat = x.reshape(-1)

    # Lane-dense 2D view: wide last dim, multiple of 128 -> unmasked stores.
    if n >= lane_width:
        C = lane_width
    else:
        C = _round_up(n, 128)
    R = pl.cdiv(n, C)

    # Only a small 1D tail pad (< C elements), and only when needed.
    pad_elems = R * C - n
    if pad_elems:
        flat = jnp.pad(flat, (0, pad_elems))
    x2 = flat.reshape(R, C)

    # Biggest row-tile that fits the per-block byte budget, aligned to the
    # dtype's sublane granule; don't exceed the (rounded-up) row count.
    tr = max(sub, (max_block_bytes // (C * itemsize)) // sub * sub)
    tr = min(tr, _round_up(R, sub))

    grid = (pl.cdiv(R, tr),)

    cost = pl.CostEstimate(flops=3 * n, transcendentals=0,
                           bytes_accessed=2 * n * itemsize)

    out = pl.pallas_call(
        _h_sigmoid_kernel,
        out_shape=jax.ShapeDtypeStruct((R, C), dtype),
        grid_spec=pltpu.PrefetchScalarGridSpec(
            num_scalar_prefetch=0,
            grid=grid,
            in_specs=[pl.BlockSpec((tr, C), lambda i: (i, 0))],
            out_specs=pl.BlockSpec((tr, C), lambda i: (i, 0)),
        ),
        compiler_params=pltpu.CompilerParams(
            dimension_semantics=("parallel",),
            vmem_limit_bytes=48 * 1024 * 1024,
        ),
        cost_estimate=cost,
    )(x2)

    out_flat = out.reshape(-1)
    if pad_elems:
        out_flat = out_flat[:n]
    return out_flat.reshape(orig_shape)


if __name__ == "__main__":
    key = jax.random.PRNGKey(0)

    # Small NCHW input, consistent with typical conv-feature usage of h_sigmoid.
    x = jax.random.normal(key, (2, 4, 16, 16), dtype=jnp.float32) * 4.0
    y = jax.block_until_ready(h_sigmoid(x))
    ref = jnp.clip(x + 3.0, 0.0, 6.0) / 6.0
    assert y.shape == x.shape and y.dtype == x.dtype
    assert jnp.max(jnp.abs(y - ref)) < 1e-6

    # Also exercise the padded-tail + bf16 (16-row sublane granule) path.
    xb = (jax.random.normal(jax.random.PRNGKey(1), (2, 3, 7, 7)) * 4.0
          ).astype(jnp.bfloat16)
    yb = jax.block_until_ready(h_sigmoid(xb))
    refb = (jnp.clip(xb.astype(jnp.float32) + 3.0, 0.0, 6.0) / 6.0)
    assert yb.shape == xb.shape and yb.dtype == xb.dtype
    assert jnp.max(jnp.abs(yb.astype(jnp.float32) - refb)) < 2e-2

    print("KERNEL_OK")
</pallas_src>

<mosaic_0001>
module attributes {stable_mosaic.version = 11 : i64} {
  func.func @_h_sigmoid_kernel(%arg0: i32, %arg1: memref<8x1024xf32, #tpu.memory_space<vmem>>, %arg2: memref<8x1024xf32, #tpu.memory_space<vmem>>) attributes {dimension_semantics = [#tpu.dimension_semantics<parallel>], iteration_bounds = array<i64: 1>, scalar_prefetch = 0 : i64, scratch_operands = 0 : i64, tpu.core_type = #tpu.core_type<tc>, window_params = [{transform_indices = @transform_0, window_bounds = array<i64: 8, 1024>}, {transform_indices = @transform_1, window_bounds = array<i64: 8, 1024>}]} {
    %c0 = arith.constant 0 : index
    %c0_0 = arith.constant 0 : index
    %0 = vector.load %arg1[%c0, %c0_0] : memref<8x1024xf32, #tpu.memory_space<vmem>>, vector<8x1024xf32>
    %cst = arith.constant 3.000000e+00 : f32
    %1 = vector.broadcast %cst : f32 to vector<8x1024xf32>
    %2 = arith.addf %0, %1 : vector<8x1024xf32>
    %cst_1 = arith.constant 0.000000e+00 : f32
    %cst_2 = arith.constant 6.000000e+00 : f32
    %3 = vector.broadcast %cst_1 : f32 to vector<8x1024xf32>
    %4 = arith.maximumf %3, %2 : vector<8x1024xf32>
    %5 = vector.broadcast %cst_2 : f32 to vector<8x1024xf32>
    %6 = arith.minimumf %5, %4 : vector<8x1024xf32>
    %cst_3 = arith.constant 6.000000e+00 : f32
    %7 = vector.broadcast %cst_3 : f32 to vector<8x1024xf32>
    %8 = arith.divf %6, %7 : vector<8x1024xf32>
    %c0_4 = arith.constant 0 : index
    %c0_5 = arith.constant 0 : index
    %9 = vector.load %arg2[%c0_4, %c0_5] : memref<8x1024xf32, #tpu.memory_space<vmem>>, vector<8x1024xf32>
    tpu.vector_store %arg2[%c0_4, %c0_5], %8 {strides = array<i32>} : memref<8x1024xf32, #tpu.memory_space<vmem>>, vector<8x1024xf32>,
    return
  }
  func.func @transform_0(%arg0: i32) -> (i32, i32) {
    %c0_i32 = arith.constant 0 : i32
    %c0_i32_0 = arith.constant 0 : i32
    return %arg0, %c0_i32 : i32, i32
  }
  func.func @transform_1(%arg0: i32) -> (i32, i32) {
    %c0_i32 = arith.constant 0 : i32
    %c0_i32_0 = arith.constant 0 : i32
    return %arg0, %c0_i32 : i32, i32
  }
}

</mosaic_0001>

<llo_original>
// kernel: tpu_custom_call.1
$region0: #{tpu_custom_call.1}
  #allocation0 [shape = 'u32[]', space=smem, size = 0x4, offset = 0x4, fixed_abs, tag = 'smem constant byte address 0x4 - core index']
  #allocation1 [shape = 'u32[144,128]{1,0:T(1,128)}', space=vmem, size = 0x12000, scoped, tag = 'internal scratch']
  %s0 = inlined_call_operand.hbm [shape: f32[2,1024], index: 0, kind: input, shape index: {}]
  %s1 = inlined_call_operand.hbm [shape: f32[2,1024], index: 1, kind: output, shape index: {}]
  %s2 = sld [smem:[#allocation0]]
  $region18: #{tpu_custom_call.1} parent=0
    _
  %s4 = ssub.s32 1, %s2
  %s5 = scalar_select 0, %s4, %s2
  $region1: #{tpu_custom_call.1} parent=0
    #allocation2 [shape = 'u8[32768]{0}', space=vmem, size = 0x8000, scoped, tag = 'input window, operand 0, single buffered']
    #allocation3 [shape = 's32[1]{0}', space=sflag, size = 0x4, scoped, tag = 'scoped memory for tpu_custom_call.1']
    #allocation4 [shape = 's32[1]{0}', space=sflag, size = 0x4, scoped, tag = 'scoped memory for tpu_custom_call.1']
    #allocation5 [shape = 'u8[32768]{0}', space=vmem, size = 0x8000, scoped, tag = 'output window, operand 0, single buffered']
    %6 = vsyncpa [#allocation3], 0
    %7 = vsyncpa [#allocation4], 0
    // Predicated region
    $region2: #{tpu_custom_call.1} parent=1 // pred_check
      _
    $region3: #{tpu_custom_call.1} parent=1 // pred_check_branch
      %9 = sbr.rel (0) target = $region5
    $region4: #{tpu_custom_call.1} parent=1 // pred_region
      %s11 = ssub.s32 1024, 256
      %12 = vsyncadd [#allocation3], %s11
      %s13 = sshll.u32 [#allocation2], 4
      %s14 = int_to_ptr.vmem [resolvable:$true] %s13
      %19 = dma.hbm_to_vmem [thread:$0]  %s0, 256, %s14, [#allocation3], 256, 256, 16
    $region5: #{tpu_custom_call.1} parent=1 // pred_fallthru
      _
    // Predicated region
    $region6: #{tpu_custom_call.1} parent=1 // pred_check
      _
    $region7: #{tpu_custom_call.1} parent=1 // pred_check_branch
      %21 = sbr.rel (0) target = $region9
    $region8: #{tpu_custom_call.1} parent=1 // pred_region
      %22 = dma.done [#allocation3], 1024
    $region9: #{tpu_custom_call.1} parent=1 // pred_fallthru
      _
    %v23 = vld [vmem:[#allocation2] sm:$0xff]
    %v24 = vld [vmem:[#allocation2 + $0x8] sm:$0xff]
    %v25 = vld [vmem:[#allocation2 + $0x10] sm:$0xff]
    %v26 = vld [vmem:[#allocation2 + $0x18] sm:$0xff]
    %v27 = vld [vmem:[#allocation2 + $0x20] sm:$0xff]
    %v28 = vld [vmem:[#allocation2 + $0x28] sm:$0xff]
    %v29 = vld [vmem:[#allocation2 + $0x30] sm:$0xff]
    %v30 = vld [vmem:[#allocation2 + $0x38] sm:$0xff]
    %v31 = vadd.f32 %v23, 3.0
    %v32 = vadd.f32 %v24, 3.0
    %v33 = vadd.f32 %v25, 3.0
    %v34 = vadd.f32 %v26, 3.0
    %v35 = vadd.f32 %v27, 3.0
    %v36 = vadd.f32 %v28, 3.0
    %v37 = vadd.f32 %v29, 3.0
    %v38 = vadd.f32 %v30, 3.0
    %v39 = vmax.f32 %v31, 0.0
    %v40 = vmax.f32 %v32, 0.0
    %v41 = vmax.f32 %v33, 0.0
    %v42 = vmax.f32 %v34, 0.0
    %v43 = vmax.f32 %v35, 0.0
    %v44 = vmax.f32 %v36, 0.0
    %v45 = vmax.f32 %v37, 0.0
    %v46 = vmax.f32 %v38, 0.0
    %v47 = vmin.f32 %v39, 6.0
    %v48 = vmin.f32 %v40, 6.0
    %v49 = vmin.f32 %v41, 6.0
    %v50 = vmin.f32 %v42, 6.0
    %v51 = vmin.f32 %v43, 6.0
    %v52 = vmin.f32 %v44, 6.0
    %v53 = vmin.f32 %v45, 6.0
    %v54 = vmin.f32 %v46, 6.0
    %v55 = vrcp.pop 6.0
    %v56 = vmul.f32 %v47, %v55
    %v57 = vmul.f32 %v48, %v55
    %v58 = vmul.f32 %v49, %v55
    %v59 = vmul.f32 %v50, %v55
    %v60 = vmul.f32 %v51, %v55
    %v61 = vmul.f32 %v52, %v55
    %v62 = vmul.f32 %v53, %v55
    %v63 = vmul.f32 %v54, %v55
    %64 = vst [vmem:[#allocation5] sm:$0xff] %v56
    %65 = vst [vmem:[#allocation5 + $0x8] sm:$0xff] %v57
    %66 = vst [vmem:[#allocation5 + $0x10] sm:$0xff] %v58
    %67 = vst [vmem:[#allocation5 + $0x18] sm:$0xff] %v59
    %68 = vst [vmem:[#allocation5 + $0x20] sm:$0xff] %v60
    %69 = vst [vmem:[#allocation5 + $0x28] sm:$0xff] %v61
    %70 = vst [vmem:[#allocation5 + $0x30] sm:$0xff] %v62
    %71 = vst [vmem:[#allocation5 + $0x38] sm:$0xff] %v63
    // Predicated region
    $region10: #{tpu_custom_call.1} parent=1 // pred_check
      _
    $region11: #{tpu_custom_call.1} parent=1 // pred_check_branch
      %73 = sbr.rel (0) target = $region13
    $region12: #{tpu_custom_call.1} parent=1 // pred_region
      %s75 = ssub.s32 1024, 256
      %76 = vsyncadd [#allocation4], %s75
      %s77 = sshll.u32 [#allocation5], 4
      %s78 = int_to_ptr.vmem [resolvable:$true] %s77
      %83 = dma.vmem_to_hbm [thread:$0]  %s78, 256, %s1, [#allocation4], 256, 256, 16
    $region13: #{tpu_custom_call.1} parent=1 // pred_fallthru
      _
    // Predicated region
    $region14: #{tpu_custom_call.1} parent=1 // pred_check
      _
    $region15: #{tpu_custom_call.1} parent=1 // pred_check_branch
      %85 = sbr.rel (0) target = $region17
    $region16: #{tpu_custom_call.1} parent=1 // pred_region
      %86 = dma.done [#allocation4], 1024
    $region17: #{tpu_custom_call.1} parent=1 // pred_fallthru
      _
    %87 = vsyncpa [#allocation3], 1
    %88 = vsyncpa [#allocation4], 1

</llo_original>
